<compile_context>
chip_gen: v7x
topology: tpu7x:2x2x1
jax: 0.10.0
libtpu: 0.0.40
codegen_flags: <defaults>
</compile_context>

<pallas_src>
import functools
import math

import jax
import jax.numpy as jnp
from jax import lax
from jax.experimental import pallas as pl
from jax.experimental.pallas import tpu as pltpu


def _round_up(x, m):
    return (x + m - 1) // m * m


def self_attention_kernel(x_ref, wqkv_ref, wo_ref, o_ref, *, m_h, m_v):
    # x_ref:    (Bt, d, n)
    # wqkv_ref: (2*m_h + m_v, d)   [W_Q*inv_scale ; W_K ; W_V], row-padded to 8
    # wo_ref:   (d, m_v)           column-padded to 8
    # o_ref:    (Bt, d, n)
    wqkv = wqkv_ref[...]
    wo = wo_ref[...]

    def body(bb, carry):
        x = x_ref[bb]                                                # (d, n)

        # Single fused projection: rows [0:m_h)=Q (pre-scaled), [m_h:2m_h)=K,
        # [2m_h:2m_h+m_v)=V.  Slices start at multiples of 8 -> aligned views.
        qkv = jnp.dot(wqkv, x, preferred_element_type=jnp.float32)  # (3h, n)
        q = qkv[0:m_h]
        k = qkv[m_h:2 * m_h]
        v = qkv[2 * m_h:2 * m_h + m_v]

        # S = K^T @ Q  (scale already folded into Q's weight).  Contract the
        # m_h axis of both operands directly (transposed-lhs MXU mode).
        s = lax.dot_general(
            k, q, (((0,), (0,)), ((), ())),
            preferred_element_type=jnp.float32)                      # (n, n)

        # Numerically-stable softmax over the lane axis; reciprocal on EUP.
        s = s - jnp.max(s, axis=-1, keepdims=True)
        p = jnp.exp(s)
        inv_l = pl.reciprocal(jnp.sum(p, axis=-1, keepdims=True), approx=True)
        a = p * inv_l                                                # (n, n)

        att = jnp.dot(v, a, preferred_element_type=jnp.float32)     # (m_v, n)
        out = jnp.dot(wo, att, preferred_element_type=jnp.float32)  # (d, n)
        o_ref[bb] = out.astype(o_ref.dtype)
        return carry

    lax.fori_loop(0, x_ref.shape[0], body, 0)


def self_attention(x, w_q, w_k, w_v, w_o, *, batch_block=8):
    """x: (B, d, n); W_Q/W_K: (m_h, d); W_V: (m_V, d); W_O: (d, m_V) -> (B, d, n)."""
    B, d, n = x.shape
    m_h = w_q.shape[0]
    m_v = w_v.shape[0]
    assert w_k.shape == (m_h, d)
    assert w_v.shape == (m_v, d)
    assert w_o.shape == (d, m_v)

    inv_scale = 1.0 / math.sqrt(m_h)

    # Pad head dims to sublane multiples (8) so the in-kernel q/k/v slices are
    # aligned, zero-copy views.  Zero rows contribute nothing to S or V@A.
    m_h_p = _round_up(m_h, 8)
    m_v_p = _round_up(m_v, 8)
    wq_p = jnp.zeros((m_h_p, d), x.dtype).at[:m_h].set(w_q * inv_scale)
    wk_p = jnp.zeros((m_h_p, d), x.dtype).at[:m_h].set(w_k)
    wv_p = jnp.zeros((m_v_p, d), x.dtype).at[:m_v].set(w_v)
    wo_p = jnp.zeros((d, m_v_p), x.dtype).at[:, :m_v].set(w_o)
    w_qkv = jnp.concatenate([wq_p, wk_p, wv_p], axis=0)   # (2*m_h_p + m_v_p, d)

    # Block the batch; keep >= 2 grid steps so both v7x TensorCores get work.
    bb = max(1, min(batch_block, pl.cdiv(B, 2)))
    B_pad = _round_up(B, bb)
    if B_pad != B:
        x = jnp.pad(x, ((0, B_pad - B), (0, 0), (0, 0)))

    kernel = functools.partial(self_attention_kernel, m_h=m_h_p, m_v=m_v_p)

    out = pl.pallas_call(
        kernel,
        out_shape=jax.ShapeDtypeStruct((B_pad, d, n), x.dtype),
        grid_spec=pltpu.PrefetchScalarGridSpec(
            num_scalar_prefetch=0,
            grid=(B_pad // bb,),
            in_specs=[
                pl.BlockSpec((bb, d, n), lambda b: (b, 0, 0)),
                pl.BlockSpec((2 * m_h_p + m_v_p, d), lambda b: (0, 0)),  # QKV (resident)
                pl.BlockSpec((d, m_v_p), lambda b: (0, 0)),              # W_O (resident)
            ],
            out_specs=pl.BlockSpec((bb, d, n), lambda b: (b, 0, 0)),
        ),
        compiler_params=pltpu.CompilerParams(
            dimension_semantics=("parallel",),
            # Working set per step (double-buffered x/out slabs + one (n, n)
            # score tile + weights) is ~1 MiB at test shapes; 32 MiB leaves
            # ample headroom on v5e (16 MiB default) without exceeding v7x.
            vmem_limit_bytes=32 * 1024 * 1024,
        ),
    )(x, w_qkv, wo_p)

    return out[:B]


if __name__ == "__main__":
    # Small shapes consistent with the module: batch B, model dim d, sequence
    # length n (lane axis), head dims m_h / m_V.  B=16 with batch_block=8
    # gives a 2-step grid (both TCs busy on v7x).
    B, d, n, m_h, m_V = 16, 32, 128, 16, 16

    key = jax.random.PRNGKey(0)
    kx, ko, kk, kq, kv = jax.random.split(key, 5)

    # Match the PyTorch init: randn * 0.01, float32.
    w_o = 0.01 * jax.random.normal(ko, (d, m_V), jnp.float32)
    w_k = 0.01 * jax.random.normal(kk, (m_h, d), jnp.float32)
    w_q = 0.01 * jax.random.normal(kq, (m_h, d), jnp.float32)
    w_v = 0.01 * jax.random.normal(kv, (m_V, d), jnp.float32)

    x = jax.random.normal(kx, (B, d, n), jnp.float32)

    y = self_attention(x, w_q, w_k, w_v, w_o, batch_block=8)
    y = jax.block_until_ready(y)

    # Pure-JAX reference of the PyTorch forward.
    k_ref = jnp.einsum("hd,bdn->bhn", w_k, x)
    q_ref = jnp.einsum("hd,bdn->bhn", w_q, x)
    v_ref = jnp.einsum("vd,bdn->bvn", w_v, x)
    scores = jnp.einsum("bhi,bhj->bij", k_ref, q_ref) / math.sqrt(m_h)
    attn = jax.nn.softmax(scores, axis=-1)
    att_out = jnp.einsum("bvi,bij->bvj", v_ref, attn)
    ref = jnp.einsum("dv,bvj->bdj", w_o, att_out)

    assert y.shape == (B, d, n)
    assert jnp.allclose(y, ref, atol=1e-5, rtol=1e-5), (
        float(jnp.max(jnp.abs(y - ref))))
    print("KERNEL_OK")
</pallas_src>

<mosaic_0001>
module attributes {stable_mosaic.version = 11 : i64} {
  func.func @self_attention_kernel(%arg0: i32, %arg1: memref<8x32x128xf32, #tpu.memory_space<vmem>>, %arg2: memref<48x32xf32, #tpu.memory_space<vmem>>, %arg3: memref<32x16xf32, #tpu.memory_space<vmem>>, %arg4: memref<8x32x128xf32, #tpu.memory_space<vmem>>) attributes {dimension_semantics = [#tpu.dimension_semantics<parallel>], iteration_bounds = array<i64: 2>, scalar_prefetch = 0 : i64, scratch_operands = 0 : i64, tpu.core_type = #tpu.core_type<tc>, window_params = [{transform_indices = @transform_0, window_bounds = array<i64: 8, 32, 128>}, {pipeline_mode = #tpu.pipeline_mode<synchronous>, transform_indices = @transform_1, window_bounds = array<i64: 48, 32>}, {pipeline_mode = #tpu.pipeline_mode<synchronous>, transform_indices = @transform_2, window_bounds = array<i64: 32, 16>}, {transform_indices = @transform_3, window_bounds = array<i64: 8, 32, 128>}]} {
    %c0 = arith.constant 0 : index
    %c0_0 = arith.constant 0 : index
    %0 = vector.load %arg2[%c0, %c0_0] : memref<48x32xf32, #tpu.memory_space<vmem>>, vector<48x32xf32>
    %c0_1 = arith.constant 0 : index
    %c0_2 = arith.constant 0 : index
    %1 = vector.load %arg3[%c0_1, %c0_2] : memref<32x16xf32, #tpu.memory_space<vmem>>, vector<32x16xf32>
    %c0_i32 = arith.constant 0 : i32
    %c8_i32 = arith.constant 8 : i32
    %2 = arith.addi %c0_i32, %c8_i32 : i32
    %c1_i32 = arith.constant 1 : i32
    scf.for %arg5 = %c0_i32 to %2 step %c1_i32  : i32 {
      %3 = arith.index_cast %arg5 : i32 to index
      %c0_4 = arith.constant 0 : index
      %c0_5 = arith.constant 0 : index
      %4 = vector.load %arg1[%3, %c0_4, %c0_5] : memref<8x32x128xf32, #tpu.memory_space<vmem>>, vector<1x32x128xf32>
      %5 = vector.shape_cast %4 : vector<1x32x128xf32> to vector<32x128xf32>
      %cst = arith.constant dense<0.000000e+00> : vector<48x128xf32>
      %6 = tpu.matmul %0, %5, %cst {dimension_numbers = #tpu.dot_dimension_numbers<[1], [0], [0], [1], [0, 0, 1, 1], [], []>} : vector<48x32xf32>, vector<32x128xf32>, vector<48x128xf32> -> vector<48x128xf32>
      %7 = vector.extract_strided_slice %6 {offsets = [0, 0], sizes = [16, 128], strides = [1, 1]} : vector<48x128xf32> to vector<16x128xf32>
      %8 = vector.extract_strided_slice %6 {offsets = [16, 0], sizes = [16, 128], strides = [1, 1]} : vector<48x128xf32> to vector<16x128xf32>
      %9 = vector.extract_strided_slice %6 {offsets = [32, 0], sizes = [16, 128], strides = [1, 1]} : vector<48x128xf32> to vector<16x128xf32>
      %cst_6 = arith.constant dense<0.000000e+00> : vector<128x128xf32>
      %10 = tpu.matmul %8, %7, %cst_6 {dimension_numbers = #tpu.dot_dimension_numbers<[0], [0], [1], [1], [0, 1, 1, 1], [], []>} : vector<16x128xf32>, vector<16x128xf32>, vector<128x128xf32> -> vector<128x128xf32>
      %cst_7 = arith.constant dense<0xFF800000> : vector<128xf32>
      %11 = vector.multi_reduction <maximumf>, %10, %cst_7 [1] : vector<128x128xf32> to vector<128xf32>
      %12 = vector.shape_cast %11 : vector<128xf32> to vector<128x1xf32>
      %13 = vector.broadcast %12 : vector<128x1xf32> to vector<128x128xf32>
      %14 = arith.subf %10, %13 : vector<128x128xf32>
      %15 = math.exp %14 : vector<128x128xf32>
      %cst_8 = arith.constant dense<0.000000e+00> : vector<128xf32>
      %16 = vector.multi_reduction <add>, %15, %cst_8 [1] : vector<128x128xf32> to vector<128xf32>
      %17 = vector.shape_cast %16 : vector<128xf32> to vector<128x1xf32>
      %18 = tpu.reciprocal %17 {approx = true} : vector<128x1xf32> -> vector<128x1xf32>
      %19 = vector.broadcast %18 : vector<128x1xf32> to vector<128x128xf32>
      %20 = arith.mulf %15, %19 : vector<128x128xf32>
      %cst_9 = arith.constant dense<0.000000e+00> : vector<16x128xf32>
      %21 = tpu.matmul %9, %20, %cst_9 {dimension_numbers = #tpu.dot_dimension_numbers<[1], [0], [0], [1], [0, 0, 1, 1], [], []>} : vector<16x128xf32>, vector<128x128xf32>, vector<16x128xf32> -> vector<16x128xf32>
      %cst_10 = arith.constant dense<0.000000e+00> : vector<32x128xf32>
      %22 = tpu.matmul %1, %21, %cst_10 {dimension_numbers = #tpu.dot_dimension_numbers<[1], [0], [0], [1], [0, 0, 1, 1], [], []>} : vector<32x16xf32>, vector<16x128xf32>, vector<32x128xf32> -> vector<32x128xf32>
      %23 = arith.index_cast %arg5 : i32 to index
      %c0_11 = arith.constant 0 : index
      %c0_12 = arith.constant 0 : index
      %24 = vector.load %arg4[%23, %c0_11, %c0_12] : memref<8x32x128xf32, #tpu.memory_space<vmem>>, vector<1x32x128xf32>
      %25 = vector.shape_cast %24 : vector<1x32x128xf32> to vector<32x128xf32>
      %26 = vector.shape_cast %22 : vector<32x128xf32> to vector<1x32x128xf32>
      tpu.vector_store %arg4[%23, %c0_11, %c0_12], %26 {strides = array<i32>} : memref<8x32x128xf32, #tpu.memory_space<vmem>>, vector<1x32x128xf32>,
    }
    %c8_i32_3 = arith.constant 8 : i32
    return
  }
  func.func @transform_0(%arg0: i32) -> (i32, i32, i32) {
    %c0_i32 = arith.constant 0 : i32
    %c0_i32_0 = arith.constant 0 : i32
    %c0_i32_1 = arith.constant 0 : i32
    return %arg0, %c0_i32, %c0_i32_0 : i32, i32, i32
  }
  func.func @transform_1(%arg0: i32) -> (i32, i32) {
    %c0_i32 = arith.constant 0 : i32
    %c0_i32_0 = arith.constant 0 : i32
    %c0_i32_1 = arith.constant 0 : i32
    return %c0_i32, %c0_i32_0 : i32, i32
  }
  func.func @transform_2(%arg0: i32) -> (i32, i32) {
    %c0_i32 = arith.constant 0 : i32
    %c0_i32_0 = arith.constant 0 : i32
    %c0_i32_1 = arith.constant 0 : i32
    return %c0_i32, %c0_i32_0 : i32, i32
  }
  func.func @transform_3(%arg0: i32) -> (i32, i32, i32) {
    %c0_i32 = arith.constant 0 : i32
    %c0_i32_0 = arith.constant 0 : i32
    %c0_i32_1 = arith.constant 0 : i32
    return %arg0, %c0_i32, %c0_i32_0 : i32, i32, i32
  }
}

</mosaic_0001>

<llo_original>
// kernel: tpu_custom_call.1
$region0: #{tpu_custom_call.1}
  #allocation0 [shape = 'u32[]', space=smem, size = 0x4, offset = 0x4, fixed_abs, tag = 'smem constant byte address 0x4 - core index']
  #allocation1 [shape = 'u32[144,128]{1,0:T(1,128)}', space=vmem, size = 0x12000, scoped, tag = 'internal scratch']
  %s0 = inlined_call_operand.hbm [shape: f32[16,32,128], index: 0, kind: input, shape index: {}]
  %s1 = inlined_call_operand.vmem [shape: f32[48,32], index: 1, kind: input, shape index: {}]
  %s2 = inlined_call_operand.vmem [shape: f32[32,16], index: 2, kind: input, shape index: {}]
  %s3 = inlined_call_operand.hbm [shape: f32[16,32,128], index: 3, kind: output, shape index: {}]
  %s4 = sld [smem:[#allocation0]]
  $region56: #{tpu_custom_call.1} parent=0
    _
  %s6 = ssub.s32 1, %s4
  %s7 = scalar_select 0, %s6, %s4
  $region1: #{tpu_custom_call.1} parent=0
    #allocation2 [shape = 'u8[262144]{0}', space=vmem, size = 0x40000, scoped, tag = 'input window, operand 0']
    #allocation3 [shape = 's32[2]{0}', space=sflag, size = 0x8, scoped, tag = 'scoped memory for tpu_custom_call.1']
    #allocation4 [shape = 's32[2]{0}', space=sflag, size = 0x8, scoped, tag = 'scoped memory for tpu_custom_call.1']
    #allocation5 [shape = 'u8[262144]{0}', space=vmem, size = 0x40000, scoped, tag = 'output window, operand 0']
    %8 = vsyncpa [#allocation3], 0
    %s9 = scalar_lea.sflag [#allocation3], 1
    %10 = vsyncpa %s9, 0
    %11 = vsyncpa [#allocation4], 0
    %s12 = scalar_lea.sflag [#allocation4], 1
    %13 = vsyncpa %s12, 0
    loop: start=0, step=1, limit=4
    $region2: #{tpu_custom_call.1} parent=1 // loop_pre_header
      _
    $region3: #{tpu_custom_call.1} parent=1 // loop_header
      %s15 = sphi 0, %s19
      %p16 = scmp.ge.s32.totalorder %s15, 4
      %s25 = sphi 0, %s27
      %s28 = sphi 0, %s25
      %s29 = sphi 0, %s28
      %s45 = sphi 0, %s29
      %s49 = sphi 0, %s49
      %s51 = sphi 0, %s49
      %s52 = sphi 0, %s51
      %s66 = sphi 0, %s52
      %s70 = sphi 0, %s70
      %s72 = sphi 0, %s70
      %s73 = sphi 0, %s72
      %s87 = sphi 0, %s73
      %s93 = sphi 0, %s95
      %s96 = sphi 0, %s93
      %s97 = sphi 0, %s96
      %s113 = sphi 0, %s97
    $region4: #{tpu_custom_call.1} parent=1 // loop_header_branch
      %18 = sbr.rel (%p16) target = $region8
    $region5: #{tpu_custom_call.1} parent=1 // loop_body
      %s20 = ssub.s32 %s15, 1
      %s21 = ssub.s32 %s15, 2
      %s22 = sadd.s32 %s15, 1
      %s23 = ssub.s32 %s15, %s22
      %p24 = scmp.eq.s32.totalorder %s23, 0
      %s26 = sadd.s32 %s25, 1
      %s27 = scalar_select %p24, %s25, %s26
      %p30 = pneg %p24
      %p31 = scmp.eq.s32.totalorder %s15, 1
      %p32 = por %p30, %p31
      %p33 = scmp.ne.s32.totalorder %s25, %s28
      %p34 = scmp.eq.s32.totalorder %s15, 0
      %p35 = por %p33, %p34
      %p36 = scmp.ne.s32.totalorder %s25, %s28
      %p37 = scmp.eq.s32.totalorder %s20, 1
      %p38 = por %p36, %p37
      %p39 = scmp.ne.s32.totalorder %s28, %s29
      %p40 = scmp.eq.s32.totalorder %s20, 0
      %p41 = por %p39, %p40
      %p42 = scmp.ne.s32.totalorder %s28, %s29
      %p43 = scmp.eq.s32.totalorder %s21, 1
      %p44 = por %p42, %p43
      %p46 = scmp.ne.s32.totalorder %s29, %s45
      %p47 = scmp.eq.s32.totalorder %s21, 0
      %p48 = por %p46, %p47
      %s50 = sadd.s32 %s49, 1
      %p53 = scmp.eq.s32.totalorder %s15, 1
      %p54 = scmp.ne.s32.totalorder %s49, %s51
      %p55 = scmp.eq.s32.totalorder %s15, 0
      %p56 = por %p54, %p55
      %p57 = scmp.ne.s32.totalorder %s49, %s51
      %p58 = scmp.eq.s32.totalorder %s20, 1
      %p59 = por %p57, %p58
      %p60 = scmp.ne.s32.totalorder %s51, %s52
      %p61 = scmp.eq.s32.totalorder %s20, 0
      %p62 = por %p60, %p61
      %p63 = scmp.ne.s32.totalorder %s51, %s52
      %p64 = scmp.eq.s32.totalorder %s21, 1
      %p65 = por %p63, %p64
      %p67 = scmp.ne.s32.totalorder %s52, %s66
      %p68 = scmp.eq.s32.totalorder %s21, 0
      %p69 = por %p67, %p68
      %s71 = sadd.s32 %s70, 1
      %p74 = scmp.eq.s32.totalorder %s15, 1
      %p75 = scmp.ne.s32.totalorder %s70, %s72
      %p76 = scmp.eq.s32.totalorder %s15, 0
      %p77 = por %p75, %p76
      %p78 = scmp.ne.s32.totalorder %s70, %s72
      %p79 = scmp.eq.s32.totalorder %s20, 1
      %p80 = por %p78, %p79
      %p81 = scmp.ne.s32.totalorder %s72, %s73
      %p82 = scmp.eq.s32.totalorder %s20, 0
      %p83 = por %p81, %p82
      %p84 = scmp.ne.s32.totalorder %s72, %s73
      %p85 = scmp.eq.s32.totalorder %s21, 1
      %p86 = por %p84, %p85
      %p88 = scmp.ne.s32.totalorder %s73, %s87
      %p89 = scmp.eq.s32.totalorder %s21, 0
      %p90 = por %p88, %p89
      %s91 = ssub.s32 %s15, %s22
      %p92 = scmp.eq.s32.totalorder %s91, 0
      %s94 = sadd.s32 %s93, 1
      %s95 = scalar_select %p92, %s93, %s94
      %p98 = pneg %p92
      %p99 = scmp.eq.s32.totalorder %s15, 1
      %p100 = por %p98, %p99
      %p101 = scmp.ne.s32.totalorder %s93, %s96
      %p102 = scmp.eq.s32.totalorder %s15, 0
      %p103 = por %p101, %p102
      %p104 = scmp.ne.s32.totalorder %s93, %s96
      %p105 = scmp.eq.s32.totalorder %s20, 1
      %p106 = por %p104, %p105
      %p107 = scmp.ne.s32.totalorder %s96, %s97
      %p108 = scmp.eq.s32.totalorder %s20, 0
      %p109 = por %p107, %p108
      %p110 = scmp.ne.s32.totalorder %s96, %s97
      %p111 = scmp.eq.s32.totalorder %s21, 1
      %p112 = por %p110, %p111
      %p114 = scmp.ne.s32.totalorder %s97, %s113
      %p115 = scmp.eq.s32.totalorder %s21, 0
      %p116 = por %p114, %p115
      %p117 = scmp.le.s32.totalorder 1, %s15
      %p118 = scmp.lt.s32.totalorder %s15, 3
      %p119 = pnand %p117, %p118
      %p120 = pneg %p119
      // Predicated region
      $region9: #{tpu_custom_call.1} parent=5 // pred_check
        _
      $region10: #{tpu_custom_call.1} parent=5 // pred_check_branch
        %122 = sbr.rel (%p119) target = $region12
      $region11: #{tpu_custom_call.1} parent=5 // pred_region
        %s123 = ssub.s32 %s15, 1
        // Predicated region
        $region13: #{tpu_custom_call.1} parent=11 // pred_check
          %p124 = pneg %p62
        $region14: #{tpu_custom_call.1} parent=11 // pred_check_branch
          %126 = sbr.rel (%p124) target = $region16
        $region15: #{tpu_custom_call.1} parent=11 // pred_region
          _
        $region16: #{tpu_custom_call.1} parent=11 // pred_fallthru
          _
        // Predicated region
        $region17: #{tpu_custom_call.1} parent=11 // pred_check
          %p127 = pneg %p83
        $region18: #{tpu_custom_call.1} parent=11 // pred_check_branch
          %129 = sbr.rel (%p127) target = $region20
        $region19: #{tpu_custom_call.1} parent=11 // pred_region
          _
        $region20: #{tpu_custom_call.1} parent=11 // pred_fallthru
          _
      $region12: #{tpu_custom_call.1} parent=5 // pred_fallthru
        _
      %p130 = scmp.lt.s32.totalorder %s15, 2
      // Predicated region
      $region21: #{tpu_custom_call.1} parent=5 // pred_check
        %p131 = pneg %p130
      $region22: #{tpu_custom_call.1} parent=5 // pred_check_branch
        %133 = sbr.rel (%p131) target = $region24
      $region23: #{tpu_custom_call.1} parent=5 // pred_region
        // Predicated region
        $region25: #{tpu_custom_call.1} parent=23 // pred_check
          %p134 = pneg %p35
        $region26: #{tpu_custom_call.1} parent=23 // pred_check_branch
          %136 = sbr.rel (%p134) target = $region28
        $region27: #{tpu_custom_call.1} parent=23 // pred_region
          %s137 = sand.u32 %s25, 1
          %s138 = scalar_lea.sflag [#allocation3], %s137
          %s139 = sand.u32 %s25, 1
          %s140 = smul.addr %s139, 256
          %s141 = scalar_lea.vmem [#allocation2], %s140
          %s142 = smul.u32 8, %s15
          %s144 = ssub.s32 4096, 4096
          %145 = vsyncadd %s138, %s144
          %s146 = smul.addr %s142, 4
          %s147 = smul.addr %s146, 128
          %s148 = scalar_lea.hbm %s0, %s147
          %s149 = sshll.u32 %s141, 4
          %s150 = int_to_ptr.vmem [resolvable:$true] %s149
          %155 = dma.hbm_to_vmem [thread:$0]  %s148, 4096, %s150, %s138, 128, 128, 8
        $region28: #{tpu_custom_call.1} parent=23 // pred_fallthru
          _
      $region24: #{tpu_custom_call.1} parent=5 // pred_fallthru
        _
      %p156 = scmp.le.s32.totalorder 1, %s15
      %p157 = scmp.lt.s32.totalorder %s15, 3
      %p158 = pnand %p156, %p157
      %p159 = pneg %p158
      // Predicated region
      $region29: #{tpu_custom_call.1} parent=5 // pred_check
        _
      $region30: #{tpu_custom_call.1} parent=5 // pred_check_branch
        %161 = sbr.rel (%p158) target = $region32
      $region31: #{tpu_custom_call.1} parent=5 // pred_region
        %s162 = ssub.s32 %s15, 1
        %s163 = sand.u32 %s28, 1
        %s164 = scalar_lea.sflag [#allocation3], %s163
        %s165 = sand.u32 %s28, 1
        %s166 = smul.addr %s165, 256
        %s167 = scalar_lea.vmem [#allocation2], %s166
        // Predicated region
        $region33: #{tpu_custom_call.1} parent=31 // pred_check
          %p168 = pneg %p41
        $region34: #{tpu_custom_call.1} parent=31 // pred_check_branch
          %170 = sbr.rel (%p168) target = $region36
        $region35: #{tpu_custom_call.1} parent=31 // pred_region
          %171 = dma.done %s164, 4096
        $region36: #{tpu_custom_call.1} parent=31 // pred_fallthru
          _
        %s172 = sand.u32 %s28, 1
        %s173 = scalar_lea.sflag [#allocation3], %s172
        %s174 = sand.u32 %s28, 1
        %s175 = smul.addr %s174, 256
        %s176 = scalar_lea.vmem [#allocation2], %s175
        %p177 = pneg %p41
        %p178 = pneg %p38
        %p179 = pneg %p62
        %p180 = pneg %p59
        %p181 = pneg %p83
        %p182 = pneg %p80
        %p183 = pneg %p109
        %p184 = pneg %p106
        %s185 = sand.u32 %s96, 1
        %s186 = scalar_lea.sflag [#allocation4], %s185
        %s187 = sand.u32 %s96, 1
        %s188 = smul.addr %s187, 256
        %s189 = scalar_lea.vmem [#allocation5], %s188
        %s190 = smul.u32 8, %s20
        %s191 = smul.u32 8, %s20
        %v192 = vld [vmem:[%s1] sm:$0xff]
        %v193 = vld [vmem:[%s1 + $0x8] sm:$0xff]
        %v194 = vld [vmem:[%s1 + $0x10] sm:$0xff]
        %v195 = vld [vmem:[%s1 + $0x18] sm:$0xff]
        %v196 = vld [vmem:[%s1 + $0x20] sm:$0xff]
        %v197 = vld [vmem:[%s1 + $0x28] sm:$0xff]
        %v198 = vld [vmem:[%s2] sm:$0xff]
        %v199 = vld [vmem:[%s2 + $0x8] sm:$0xff]
        %v200 = vld [vmem:[%s2 + $0x10] sm:$0xff]
        %v201 = vld [vmem:[%s2 + $0x18] sm:$0xff]
        loop: start=0, step=1, limit=8
        $region37: #{tpu_custom_call.1} parent=31 // loop_pre_header
          _
        $region38: #{tpu_custom_call.1} parent=31 // loop_header
          %s203 = sphi 0, %s207
          %p204 = scmp.ge.s32.totalorder %s203, 8
        $region39: #{tpu_custom_call.1} parent=31 // loop_header_branch
          %206 = sbr.rel (%p204) target = $region43
        $region40: #{tpu_custom_call.1} parent=31 // loop_body
          %s208 = smul.u32 %s203, 32
          %s209 = scalar_lea.vmem %s167, %s208 [#allocation2]
          %v210 = vld [vmem:[%s209] sm:$0xff]
          %v211 = vld [vmem:[%s209 + $0x8] sm:$0xff]
          %v212 = vld [vmem:[%s209 + $0x10] sm:$0xff]
          %v213 = vld [vmem:[%s209 + $0x18] sm:$0xff]
          %vm214 = vcmask 261120
          %v216 = vsel %vm214, %v192, 0
          %v219 = vsel %vm214, %v193, 0
          %v222 = vsel %vm214, %v194, 0
          %v225 = vsel %vm214, %v195, 0
          %v228 = vsel %vm214, %v196, 0
          %v231 = vsel %vm214, %v197, 0
          %233 = vmatprep.subr.mxu0 0.0
          %234 = vmatpush1.msra.mxu0 %v210
          %235 = vmatprep.subr.mxu0 0.0
          %236 = vmatpush1.msra.mxu0 %v211
          %237 = vmatprep.subr.mxu0 0.0
          %238 = vmatpush1.msra.mxu0 %v212
          %239 = vmatprep.subr.mxu0 0.0
          %240 = vmatpush1.msra.mxu0 %v213
          %241 = vmatprep.subr.mxu0 0.0
          %242 = vmatpush1.msra.mxu0 0.0
          %243 = vmatprep.subr.mxu0 0.0
          %244 = vmatpush1.msra.mxu0 0.0
          %245 = vmatprep.subr.mxu0 0.0
          %246 = vmatpush1.msra.mxu0 0.0
          %247 = vmatprep.subr.mxu0 0.0
          %248 = vmatpush1.msra.mxu0 0.0
          %249 = vmatprep.subr.mxu0 0.0
          %250 = vmatpush1.msra.mxu0 0.0
          %251 = vmatprep.subr.mxu0 0.0
          %252 = vmatpush1.msra.mxu0 0.0
          %253 = vmatprep.subr.mxu0 0.0
          %254 = vmatpush1.msra.mxu0 0.0
          %255 = vmatprep.subr.mxu0 0.0
          %256 = vmatpush1.msra.mxu0 0.0
          %257 = vmatprep.subr.mxu0 0.0
          %258 = vmatpush1.msra.mxu0 0.0
          %259 = vmatprep.subr.mxu0 0.0
          %260 = vmatpush1.msra.mxu0 0.0
          %261 = vmatprep.subr.mxu0 0.0
          %262 = vmatpush1.msra.mxu0 0.0
          %263 = vmatprep.subr.mxu0 0.0
          %264 = vmatpush1.msra.mxu0 0.0
          %265 = vmatprep.subr.mxu0 0.0
          %266 = vmatpush1.msra.mxu0 0.0
          %267 = vmatprep.subr.mxu0 0.0
          %268 = vmatpush1.msra.mxu0 0.0
          %269 = vmatprep.subr.mxu0 0.0
          %270 = vmatpush1.msra.mxu0 0.0
          %271 = vmatprep.subr.mxu0 0.0
          %272 = vmatpush1.msra.mxu0 0.0
          %273 = vmatprep.subr.mxu0 0.0
          %274 = vmatpush1.msra.mxu0 0.0
          %275 = vmatprep.subr.mxu0 0.0
          %276 = vmatpush1.msra.mxu0 0.0
          %277 = vmatprep.subr.mxu0 0.0
          %278 = vmatpush1.msra.mxu0 0.0
          %279 = vmatprep.subr.mxu0 0.0
          %280 = vmatpush1.msra.mxu0 0.0
          %281 = vmatprep.subr.mxu0 0.0
          %282 = vmatpush1.msra.mxu0 0.0
          %283 = vmatprep.subr.mxu0 0.0
          %284 = vmatpush1.msra.mxu0 0.0
          %285 = vmatprep.subr.mxu0 0.0
          %286 = vmatpush1.msra.mxu0 0.0
          %287 = vmatprep.subr.mxu0 0.0
          %288 = vmatpush1.msra.mxu0 0.0
          %289 = vmatprep.subr.mxu0 0.0
          %290 = vmatpush1.msra.mxu0 0.0
          %291 = vmatprep.subr.mxu0 0.0
          %292 = vmatpush1.msra.mxu0 0.0
          %293 = vmatprep.subr.mxu0 0.0
          %294 = vmatpush1.msra.mxu0 0.0
          %295 = vmatprep.subr.mxu0 0.0
          %296 = vmatpush1.msra.mxu0 0.0
          %297 = vmatprep.mubr.f32.mxu0 0.0
          %298 = vmatmul.mubr.f32.gmra.mrb[0].mxu0 %v216
          %v299 = vpop.f32.mrb[0].mxu0
          %v300 = vadd.f32 0.0, %v299
          %v301 = vpop.f32.mrb[0].mxu0
          %302 = vmatprep.mubr.f32.mxu0 0.0
          %303 = vmatmul.mubr.f32.gmra.mrb[0].mxu0 %v219
          %v304 = vpop.f32.mrb[0].mxu0
          %v305 = vadd.f32 0.0, %v304
          %v306 = vpop.f32.mrb[0].mxu0
          %307 = vmatprep.mubr.f32.mxu0 0.0
          %308 = vmatmul.mubr.f32.gmra.mrb[0].mxu0 %v222
          %v309 = vpop.f32.mrb[0].mxu0
          %v310 = vadd.f32 0.0, %v309
          %v311 = vpop.f32.mrb[0].mxu0
          %312 = vmatprep.mubr.f32.mxu0 0.0
          %313 = vmatmul.mubr.f32.gmra.mrb[0].mxu0 %v225
          %v314 = vpop.f32.mrb[0].mxu0
          %v315 = vadd.f32 0.0, %v314
          %v316 = vpop.f32.mrb[0].mxu0
          %317 = vmatprep.mubr.f32.mxu0 0.0
          %318 = vmatmul.mubr.f32.gmra.mrb[0].mxu0 %v228
          %v319 = vpop.f32.mrb[0].mxu0
          %v320 = vadd.f32 0.0, %v319
          %v321 = vpop.f32.mrb[0].mxu0
          %322 = vmatprep.mubr.f32.mxu0 0.0
          %323 = vmatmul.mubr.f32.gmra.mrb[0].mxu0 %v231
          %v324 = vpop.f32.mrb[0].mxu0
          %v325 = vadd.f32 0.0, %v324
          %v326 = vpop.f32.mrb[0].mxu0
          %327 = vdwg.mxu0
          %328 = vxpose.xlu0.b32.start [1/16] %v310, 128
          %329 = vxpose.xlu0.b32.cont [2/16] %v315, 128
          %330 = vxpose.xlu0.b32.cont [3/16] 0.0, 128
          %331 = vxpose.xlu0.b32.cont [4/16] 0.0, 128
          %332 = vxpose.xlu0.b32.cont [5/16] 0.0, 128
          %333 = vxpose.xlu0.b32.cont [6/16] 0.0, 128
          %334 = vxpose.xlu0.b32.cont [7/16] 0.0, 128
          %335 = vxpose.xlu0.b32.cont [8/16] 0.0, 128
          %336 = vxpose.xlu0.b32.cont [9/16] 0.0, 128
          %337 = vxpose.xlu0.b32.cont [10/16] 0.0, 128
          %338 = vxpose.xlu0.b32.cont [11/16] 0.0, 128
          %339 = vxpose.xlu0.b32.cont [12/16] 0.0, 128
          %340 = vxpose.xlu0.b32.cont [13/16] 0.0, 128
          %341 = vxpose.xlu0.b32.cont [14/16] 0.0, 128
          %342 = vxpose.xlu0.b32.cont [15/16] 0.0, 128
          %343 = vxpose.xlu0.b32.end [16/16] 0.0, 128
          %v344 = vpop.trf.xlu0
          %v345 = vpop.trf.xlu0
          %v346 = vpop.trf.xlu0
          %v347 = vpop.trf.xlu0
          %v348 = vpop.trf.xlu0
          %v349 = vpop.trf.xlu0
          %v350 = vpop.trf.xlu0
          %v351 = vpop.trf.xlu0
          %v352 = vpop.trf.xlu0
          %v353 = vpop.trf.xlu0
          %v354 = vpop.trf.xlu0
          %v355 = vpop.trf.xlu0
          %v356 = vpop.trf.xlu0
          %v357 = vpop.trf.xlu0
          %v358 = vpop.trf.xlu0
          %v359 = vpop.trf.xlu0
          %vm360 = vcmask 130048
          %v362 = vsel %vm360, %v344, 0
          %v365 = vsel %vm360, %v345, 0
          %v368 = vsel %vm360, %v346, 0
          %v371 = vsel %vm360, %v347, 0
          %v374 = vsel %vm360, %v348, 0
          %v377 = vsel %vm360, %v349, 0
          %v380 = vsel %vm360, %v350, 0
          %v383 = vsel %vm360, %v351, 0
          %v386 = vsel %vm360, %v352, 0
          %v389 = vsel %vm360, %v353, 0
          %v392 = vsel %vm360, %v354, 0
          %v395 = vsel %vm360, %v355, 0
          %v398 = vsel %vm360, %v356, 0
          %v401 = vsel %vm360, %v357, 0
          %v404 = vsel %vm360, %v358, 0
          %v407 = vsel %vm360, %v359, 0
          %409 = vmatprep.subr.mxu0 0.0
          %410 = vmatpush1.msra.mxu0 %v300
          %411 = vmatprep.subr.mxu0 0.0
          %412 = vmatpush1.msra.mxu0 %v305
          %413 = vmatprep.subr.mxu0 0.0
          %414 = vmatpush1.msra.mxu0 0.0
          %415 = vmatprep.subr.mxu0 0.0
          %416 = vmatpush1.msra.mxu0 0.0
          %417 = vmatprep.subr.mxu0 0.0
          %418 = vmatpush1.msra.mxu0 0.0
          %419 = vmatprep.subr.mxu0 0.0
          %420 = vmatpush1.msra.mxu0 0.0
          %421 = vmatprep.subr.mxu0 0.0
          %422 = vmatpush1.msra.mxu0 0.0
          %423 = vmatprep.subr.mxu0 0.0
          %424 = vmatpush1.msra.mxu0 0.0
          %425 = vmatprep.subr.mxu0 0.0
          %426 = vmatpush1.msra.mxu0 0.0
          %427 = vmatprep.subr.mxu0 0.0
          %428 = vmatpush1.msra.mxu0 0.0
          %429 = vmatprep.subr.mxu0 0.0
          %430 = vmatpush1.msra.mxu0 0.0
          %431 = vmatprep.subr.mxu0 0.0
          %432 = vmatpush1.msra.mxu0 0.0
          %433 = vmatprep.subr.mxu0 0.0
          %434 = vmatpush1.msra.mxu0 0.0
          %435 = vmatprep.subr.mxu0 0.0
          %436 = vmatpush1.msra.mxu0 0.0
          %437 = vmatprep.subr.mxu0 0.0
          %438 = vmatpush1.msra.mxu0 0.0
          %439 = vmatprep.subr.mxu0 0.0
          %440 = vmatpush1.msra.mxu0 0.0
          %441 = vmatprep.subr.mxu0 0.0
          %442 = vmatpush1.msra.mxu0 0.0
          %443 = vmatprep.subr.mxu0 0.0
          %444 = vmatpush1.msra.mxu0 0.0
          %445 = vmatprep.subr.mxu0 0.0
          %446 = vmatpush1.msra.mxu0 0.0
          %447 = vmatprep.subr.mxu0 0.0
          %448 = vmatpush1.msra.mxu0 0.0
          %449 = vmatprep.subr.mxu0 0.0
          %450 = vmatpush1.msra.mxu0 0.0
          %451 = vmatprep.subr.mxu0 0.0
          %452 = vmatpush1.msra.mxu0 0.0
          %453 = vmatprep.subr.mxu0 0.0
          %454 = vmatpush1.msra.mxu0 0.0
          %455 = vmatprep.subr.mxu0 0.0
          %456 = vmatpush1.msra.mxu0 0.0
          %457 = vmatprep.subr.mxu0 0.0
          %458 = vmatpush1.msra.mxu0 0.0
          %459 = vmatprep.subr.mxu0 0.0
          %460 = vmatpush1.msra.mxu0 0.0
          %461 = vmatprep.subr.mxu0 0.0
          %462 = vmatpush1.msra.mxu0 0.0
          %463 = vmatprep.subr.mxu0 0.0
          %464 = vmatpush1.msra.mxu0 0.0
          %465 = vmatprep.subr.mxu0 0.0
          %466 = vmatpush1.msra.mxu0 0.0
          %467 = vmatprep.subr.mxu0 0.0
          %468 = vmatpush1.msra.mxu0 0.0
          %469 = vmatprep.subr.mxu0 0.0
          %470 = vmatpush1.msra.mxu0 0.0
          %471 = vmatprep.subr.mxu0 0.0
          %472 = vmatpush1.msra.mxu0 0.0
          %473 = vmatprep.mubr.f32.mxu0 0.0
          %474 = vmatmul.mubr.f32.gmra.mrb[0].mxu0 %v362
          %v475 = vpop.f32.mrb[0].mxu0
          %v476 = vadd.f32 0.0, %v475
          %v477 = vpop.f32.mrb[0].mxu0
          %478 = vmatprep.mubr.f32.mxu0 0.0
          %479 = vmatmul.mubr.f32.gmra.mrb[0].mxu0 %v365
          %v480 = vpop.f32.mrb[0].mxu0
          %v481 = vadd.f32 0.0, %v480
          %v482 = vpop.f32.mrb[0].mxu0
          %483 = vmatprep.mubr.f32.mxu0 0.0
          %484 = vmatmul.mubr.f32.gmra.mrb[0].mxu0 %v368
          %v485 = vpop.f32.mrb[0].mxu0
          %v486 = vadd.f32 0.0, %v485
          %v487 = vpop.f32.mrb[0].mxu0
          %488 = vmatprep.mubr.f32.mxu0 0.0
          %489 = vmatmul.mubr.f32.gmra.mrb[0].mxu0 %v371
          %v490 = vpop.f32.mrb[0].mxu0
          %v491 = vadd.f32 0.0, %v490
          %v492 = vpop.f32.mrb[0].mxu0
          %493 = vmatprep.mubr.f32.mxu0 0.0
          %494 = vmatmul.mubr.f32.gmra.mrb[0].mxu0 %v374
          %v495 = vpop.f32.mrb[0].mxu0
          %v496 = vadd.f32 0.0, %v495
          %v497 = vpop.f32.mrb[0].mxu0
          %498 = vmatprep.mubr.f32.mxu0 0.0
          %499 = vmatmul.mubr.f32.gmra.mrb[0].mxu0 %v377
          %v500 = vpop.f32.mrb[0].mxu0
          %v501 = vadd.f32 0.0, %v500
          %v502 = vpop.f32.mrb[0].mxu0
          %503 = vmatprep.mubr.f32.mxu0 0.0
          %504 = vmatmul.mubr.f32.gmra.mrb[0].mxu0 %v380
          %v505 = vpop.f32.mrb[0].mxu0
          %v506 = vadd.f32 0.0, %v505
          %v507 = vpop.f32.mrb[0].mxu0
          %508 = vmatprep.mubr.f32.mxu0 0.0
          %509 = vmatmul.mubr.f32.gmra.mrb[0].mxu0 %v383
          %v510 = vpop.f32.mrb[0].mxu0
          %v511 = vadd.f32 0.0, %v510
          %v512 = vpop.f32.mrb[0].mxu0
          %513 = vmatprep.mubr.f32.mxu0 0.0
          %514 = vmatmul.mubr.f32.gmra.mrb[0].mxu0 %v386
          %v515 = vpop.f32.mrb[0].mxu0
          %v516 = vadd.f32 0.0, %v515
          %v517 = vpop.f32.mrb[0].mxu0
          %518 = vmatprep.mubr.f32.mxu0 0.0
          %519 = vmatmul.mubr.f32.gmra.mrb[0].mxu0 %v389
          %v520 = vpop.f32.mrb[0].mxu0
          %v521 = vadd.f32 0.0, %v520
          %v522 = vpop.f32.mrb[0].mxu0
          %523 = vmatprep.mubr.f32.mxu0 0.0
          %524 = vmatmul.mubr.f32.gmra.mrb[0].mxu0 %v392
          %v525 = vpop.f32.mrb[0].mxu0
          %v526 = vadd.f32 0.0, %v525
          %v527 = vpop.f32.mrb[0].mxu0
          %528 = vmatprep.mubr.f32.mxu0 0.0
          %529 = vmatmul.mubr.f32.gmra.mrb[0].mxu0 %v395
          %v530 = vpop.f32.mrb[0].mxu0
          %v531 = vadd.f32 0.0, %v530
          %v532 = vpop.f32.mrb[0].mxu0
          %533 = vmatprep.mubr.f32.mxu0 0.0
          %534 = vmatmul.mubr.f32.gmra.mrb[0].mxu0 %v398
          %v535 = vpop.f32.mrb[0].mxu0
          %v536 = vadd.f32 0.0, %v535
          %v537 = vpop.f32.mrb[0].mxu0
          %538 = vmatprep.mubr.f32.mxu0 0.0
          %539 = vmatmul.mubr.f32.gmra.mrb[0].mxu0 %v401
          %v540 = vpop.f32.mrb[0].mxu0
          %v541 = vadd.f32 0.0, %v540
          %v542 = vpop.f32.mrb[0].mxu0
          %543 = vmatprep.mubr.f32.mxu0 0.0
          %544 = vmatmul.mubr.f32.gmra.mrb[0].mxu0 %v404
          %v545 = vpop.f32.mrb[0].mxu0
          %v546 = vadd.f32 0.0, %v545
          %v547 = vpop.f32.mrb[0].mxu0
          %548 = vmatprep.mubr.f32.mxu0 0.0
          %549 = vmatmul.mubr.f32.gmra.mrb[0].mxu0 %v407
          %v550 = vpop.f32.mrb[0].mxu0
          %v551 = vadd.f32 0.0, %v550
          %v552 = vpop.f32.mrb[0].mxu0
          %553 = vdwg.mxu0
          %554 = vmax.xlane.f32.xlu0 %v476
          %v555 = vpop.xlane.xlu0 %554
          %556 = vmax.xlane.f32.xlu0 %v481
          %v557 = vpop.xlane.xlu0 %556
          %558 = vmax.xlane.f32.xlu0 %v486
          %v559 = vpop.xlane.xlu0 %558
          %560 = vmax.xlane.f32.xlu0 %v491
          %v561 = vpop.xlane.xlu0 %560
          %562 = vmax.xlane.f32.xlu0 %v496
          %v563 = vpop.xlane.xlu0 %562
          %564 = vmax.xlane.f32.xlu0 %v501
          %v565 = vpop.xlane.xlu0 %564
          %566 = vmax.xlane.f32.xlu0 %v506
          %v567 = vpop.xlane.xlu0 %566
          %568 = vmax.xlane.f32.xlu0 %v511
          %v569 = vpop.xlane.xlu0 %568
          %570 = vmax.xlane.f32.xlu0 %v516
          %v571 = vpop.xlane.xlu0 %570
          %572 = vmax.xlane.f32.xlu0 %v521
          %v573 = vpop.xlane.xlu0 %572
          %574 = vmax.xlane.f32.xlu0 %v526
          %v575 = vpop.xlane.xlu0 %574
          %576 = vmax.xlane.f32.xlu0 %v531
          %v577 = vpop.xlane.xlu0 %576
          %578 = vmax.xlane.f32.xlu0 %v536
          %v579 = vpop.xlane.xlu0 %578
          %580 = vmax.xlane.f32.xlu0 %v541
          %v581 = vpop.xlane.xlu0 %580
          %582 = vmax.xlane.f32.xlu0 %v546
          %v583 = vpop.xlane.xlu0 %582
          %584 = vmax.xlane.f32.xlu0 %v551
          %v585 = vpop.xlane.xlu0 %584
          %v586 = vsub.f32 %v476, %v555
          %v587 = vsub.f32 %v481, %v557
          %v588 = vsub.f32 %v486, %v559
          %v589 = vsub.f32 %v491, %v561
          %v590 = vsub.f32 %v496, %v563
          %v591 = vsub.f32 %v501, %v565
          %v592 = vsub.f32 %v506, %v567
          %v593 = vsub.f32 %v511, %v569
          %v594 = vsub.f32 %v516, %v571
          %v595 = vsub.f32 %v521, %v573
          %v596 = vsub.f32 %v526, %v575
          %v597 = vsub.f32 %v531, %v577
          %v598 = vsub.f32 %v536, %v579
          %v599 = vsub.f32 %v541, %v581
          %v600 = vsub.f32 %v546, %v583
          %v601 = vsub.f32 %v551, %v585
          %v602 = vmul.f32 %v586, 1.442695
          %v603 = vpow.pop %v602
          %v604 = vmul.f32 %v587, 1.442695
          %v605 = vpow.pop %v604
          %v606 = vmul.f32 %v588, 1.442695
          %v607 = vpow.pop %v606
          %v608 = vmul.f32 %v589, 1.442695
          %v609 = vpow.pop %v608
          %v610 = vmul.f32 %v590, 1.442695
          %v611 = vpow.pop %v610
          %v612 = vmul.f32 %v591, 1.442695
          %v613 = vpow.pop %v612
          %v614 = vmul.f32 %v592, 1.442695
          %v615 = vpow.pop %v614
          %v616 = vmul.f32 %v593, 1.442695
          %v617 = vpow.pop %v616
          %v618 = vmul.f32 %v594, 1.442695
          %v619 = vpow.pop %v618
          %v620 = vmul.f32 %v595, 1.442695
          %v621 = vpow.pop %v620
          %v622 = vmul.f32 %v596, 1.442695
          %v623 = vpow.pop %v622
          %v624 = vmul.f32 %v597, 1.442695
          %v625 = vpow.pop %v624
          %v626 = vmul.f32 %v598, 1.442695
          %v627 = vpow.pop %v626
          %v628 = vmul.f32 %v599, 1.442695
          %v629 = vpow.pop %v628
          %v630 = vmul.f32 %v600, 1.442695
          %v631 = vpow.pop %v630
          %v632 = vmul.f32 %v601, 1.442695
          %v633 = vpow.pop %v632
          %634 = vadd.xlane.f32.xlu0 %v603
          %v635 = vpop.xlane.xlu0 %634
          %636 = vadd.xlane.f32.xlu0 %v605
          %v637 = vpop.xlane.xlu0 %636
          %638 = vadd.xlane.f32.xlu0 %v607
          %v639 = vpop.xlane.xlu0 %638
          %640 = vadd.xlane.f32.xlu0 %v609
          %v641 = vpop.xlane.xlu0 %640
          %642 = vadd.xlane.f32.xlu0 %v611
          %v643 = vpop.xlane.xlu0 %642
          %644 = vadd.xlane.f32.xlu0 %v613
          %v645 = vpop.xlane.xlu0 %644
          %646 = vadd.xlane.f32.xlu0 %v615
          %v647 = vpop.xlane.xlu0 %646
          %648 = vadd.xlane.f32.xlu0 %v617
          %v649 = vpop.xlane.xlu0 %648
          %650 = vadd.xlane.f32.xlu0 %v619
          %v651 = vpop.xlane.xlu0 %650
          %652 = vadd.xlane.f32.xlu0 %v621
          %v653 = vpop.xlane.xlu0 %652
          %654 = vadd.xlane.f32.xlu0 %v623
          %v655 = vpop.xlane.xlu0 %654
          %656 = vadd.xlane.f32.xlu0 %v625
          %v657 = vpop.xlane.xlu0 %656
          %658 = vadd.xlane.f32.xlu0 %v627
          %v659 = vpop.xlane.xlu0 %658
          %660 = vadd.xlane.f32.xlu0 %v629
          %v661 = vpop.xlane.xlu0 %660
          %662 = vadd.xlane.f32.xlu0 %v631
          %v663 = vpop.xlane.xlu0 %662
          %664 = vadd.xlane.f32.xlu0 %v633
          %v665 = vpop.xlane.xlu0 %664
          %v666 = vrcp.pop %v635
          %v667 = vrcp.pop %v637
          %v668 = vrcp.pop %v639
          %v669 = vrcp.pop %v641
          %v670 = vrcp.pop %v643
          %v671 = vrcp.pop %v645
          %v672 = vrcp.pop %v647
          %v673 = vrcp.pop %v649
          %v674 = vrcp.pop %v651
          %v675 = vrcp.pop %v653
          %v676 = vrcp.pop %v655
          %v677 = vrcp.pop %v657
          %v678 = vrcp.pop %v659
          %v679 = vrcp.pop %v661
          %v680 = vrcp.pop %v663
          %v681 = vrcp.pop %v665
          %v682 = vmul.f32 %v603, %v666
          %v683 = vmul.f32 %v605, %v667
          %v684 = vmul.f32 %v607, %v668
          %v685 = vmul.f32 %v609, %v669
          %v686 = vmul.f32 %v611, %v670
          %v687 = vmul.f32 %v613, %v671
          %v688 = vmul.f32 %v615, %v672
          %v689 = vmul.f32 %v617, %v673
          %v690 = vmul.f32 %v619, %v674
          %v691 = vmul.f32 %v621, %v675
          %v692 = vmul.f32 %v623, %v676
          %v693 = vmul.f32 %v625, %v677
          %v694 = vmul.f32 %v627, %v678
          %v695 = vmul.f32 %v629, %v679
          %v696 = vmul.f32 %v631, %v680
          %v697 = vmul.f32 %v633, %v681
          %698 = vmatprep.subr.mxu0 0.0
          %699 = vmatpush1.msra.mxu0 %v682
          %700 = vmatprep.subr.mxu0 0.0
          %701 = vmatpush1.msra.mxu0 %v683
          %702 = vmatprep.subr.mxu0 0.0
          %703 = vmatpush1.msra.mxu0 %v684
          %704 = vmatprep.subr.mxu0 0.0
          %705 = vmatpush1.msra.mxu0 %v685
          %706 = vmatprep.subr.mxu0 0.0
          %707 = vmatpush1.msra.mxu0 %v686
          %708 = vmatprep.subr.mxu0 0.0
          %709 = vmatpush1.msra.mxu0 %v687
          %710 = vmatprep.subr.mxu0 0.0
          %711 = vmatpush1.msra.mxu0 %v688
          %712 = vmatprep.subr.mxu0 0.0
          %713 = vmatpush1.msra.mxu0 %v689
          %714 = vmatprep.subr.mxu0 0.0
          %715 = vmatpush1.msra.mxu0 %v690
          %716 = vmatprep.subr.mxu0 0.0
          %717 = vmatpush1.msra.mxu0 %v691
          %718 = vmatprep.subr.mxu0 0.0
          %719 = vmatpush1.msra.mxu0 %v692
          %720 = vmatprep.subr.mxu0 0.0
          %721 = vmatpush1.msra.mxu0 %v693
          %722 = vmatprep.subr.mxu0 0.0
          %723 = vmatpush1.msra.mxu0 %v694
          %724 = vmatprep.subr.mxu0 0.0
          %725 = vmatpush1.msra.mxu0 %v695
          %726 = vmatprep.subr.mxu0 0.0
          %727 = vmatpush1.msra.mxu0 %v696
          %728 = vmatprep.subr.mxu0 0.0
          %729 = vmatpush1.msra.mxu0 %v697
          %730 = vmatprep.subr.mxu0 0.0
          %731 = vmatpush1.msra.mxu0 0.0
          %732 = vmatprep.subr.mxu0 0.0
          %733 = vmatpush1.msra.mxu0 0.0
          %734 = vmatprep.subr.mxu0 0.0
          %735 = vmatpush1.msra.mxu0 0.0
          %736 = vmatprep.subr.mxu0 0.0
          %737 = vmatpush1.msra.mxu0 0.0
          %738 = vmatprep.subr.mxu0 0.0
          %739 = vmatpush1.msra.mxu0 0.0
          %740 = vmatprep.subr.mxu0 0.0
          %741 = vmatpush1.msra.mxu0 0.0
          %742 = vmatprep.subr.mxu0 0.0
          %743 = vmatpush1.msra.mxu0 0.0
          %744 = vmatprep.subr.mxu0 0.0
          %745 = vmatpush1.msra.mxu0 0.0
          %746 = vmatprep.subr.mxu0 0.0
          %747 = vmatpush1.msra.mxu0 0.0
          %748 = vmatprep.subr.mxu0 0.0
          %749 = vmatpush1.msra.mxu0 0.0
          %750 = vmatprep.subr.mxu0 0.0
          %751 = vmatpush1.msra.mxu0 0.0
          %752 = vmatprep.subr.mxu0 0.0
          %753 = vmatpush1.msra.mxu0 0.0
          %754 = vmatprep.subr.mxu0 0.0
          %755 = vmatpush1.msra.mxu0 0.0
          %756 = vmatprep.subr.mxu0 0.0
          %757 = vmatpush1.msra.mxu0 0.0
          %758 = vmatprep.subr.mxu0 0.0
          %759 = vmatpush1.msra.mxu0 0.0
          %760 = vmatprep.subr.mxu0 0.0
          %761 = vmatpush1.msra.mxu0 0.0
          %762 = vmatprep.mubr.f32.mxu0 0.0
          %763 = vmatmul.mubr.f32.gmra.mrb[0].mxu0 %v320
          %v764 = vpop.f32.mrb[0].mxu0
          %v765 = vadd.f32 0.0, %v764
          %v766 = vpop.f32.mrb[0].mxu0
          %767 = vmatprep.mubr.f32.mxu0 0.0
          %768 = vmatmul.mubr.f32.gmra.mrb[0].mxu0 %v325
          %v769 = vpop.f32.mrb[0].mxu0
          %v770 = vadd.f32 0.0, %v769
          %v771 = vpop.f32.mrb[0].mxu0
          %772 = vdwg.mxu0
          %v774 = vsel %vm360, %v198, 0
          %v777 = vsel %vm360, %v199, 0
          %v780 = vsel %vm360, %v200, 0
          %v783 = vsel %vm360, %v201, 0
          %785 = vmatprep.subr.mxu0 0.0
          %786 = vmatpush1.msra.mxu0 %v765
          %787 = vmatprep.subr.mxu0 0.0
          %788 = vmatpush1.msra.mxu0 %v770
          %789 = vmatprep.subr.mxu0 0.0
          %790 = vmatpush1.msra.mxu0 0.0
          %791 = vmatprep.subr.mxu0 0.0
          %792 = vmatpush1.msra.mxu0 0.0
          %793 = vmatprep.subr.mxu0 0.0
          %794 = vmatpush1.msra.mxu0 0.0
          %795 = vmatprep.subr.mxu0 0.0
          %796 = vmatpush1.msra.mxu0 0.0
          %797 = vmatprep.subr.mxu0 0.0
          %798 = vmatpush1.msra.mxu0 0.0
          %799 = vmatprep.subr.mxu0 0.0
          %800 = vmatpush1.msra.mxu0 0.0
          %801 = vmatprep.subr.mxu0 0.0
          %802 = vmatpush1.msra.mxu0 0.0
          %803 = vmatprep.subr.mxu0 0.0
          %804 = vmatpush1.msra.mxu0 0.0
          %805 = vmatprep.subr.mxu0 0.0
          %806 = vmatpush1.msra.mxu0 0.0
          %807 = vmatprep.subr.mxu0 0.0
          %808 = vmatpush1.msra.mxu0 0.0
          %809 = vmatprep.subr.mxu0 0.0
          %810 = vmatpush1.msra.mxu0 0.0
          %811 = vmatprep.subr.mxu0 0.0
          %812 = vmatpush1.msra.mxu0 0.0
          %813 = vmatprep.subr.mxu0 0.0
          %814 = vmatpush1.msra.mxu0 0.0
          %815 = vmatprep.subr.mxu0 0.0
          %816 = vmatpush1.msra.mxu0 0.0
          %817 = vmatprep.subr.mxu0 0.0
          %818 = vmatpush1.msra.mxu0 0.0
          %819 = vmatprep.subr.mxu0 0.0
          %820 = vmatpush1.msra.mxu0 0.0
          %821 = vmatprep.subr.mxu0 0.0
          %822 = vmatpush1.msra.mxu0 0.0
          %823 = vmatprep.subr.mxu0 0.0
          %824 = vmatpush1.msra.mxu0 0.0
          %825 = vmatprep.subr.mxu0 0.0
          %826 = vmatpush1.msra.mxu0 0.0
          %827 = vmatprep.subr.mxu0 0.0
          %828 = vmatpush1.msra.mxu0 0.0
          %829 = vmatprep.subr.mxu0 0.0
          %830 = vmatpush1.msra.mxu0 0.0
          %831 = vmatprep.subr.mxu0 0.0
          %832 = vmatpush1.msra.mxu0 0.0
          %833 = vmatprep.subr.mxu0 0.0
          %834 = vmatpush1.msra.mxu0 0.0
          %835 = vmatprep.subr.mxu0 0.0
          %836 = vmatpush1.msra.mxu0 0.0
          %837 = vmatprep.subr.mxu0 0.0
          %838 = vmatpush1.msra.mxu0 0.0
          %839 = vmatprep.subr.mxu0 0.0
          %840 = vmatpush1.msra.mxu0 0.0
          %841 = vmatprep.subr.mxu0 0.0
          %842 = vmatpush1.msra.mxu0 0.0
          %843 = vmatprep.subr.mxu0 0.0
          %844 = vmatpush1.msra.mxu0 0.0
          %845 = vmatprep.subr.mxu0 0.0
          %846 = vmatpush1.msra.mxu0 0.0
          %847 = vmatprep.subr.mxu0 0.0
          %848 = vmatpush1.msra.mxu0 0.0
          %849 = vmatprep.mubr.f32.mxu0 0.0
          %850 = vmatmul.mubr.f32.gmra.mrb[0].mxu0 %v774
          %v851 = vpop.f32.mrb[0].mxu0
          %v852 = vadd.f32 0.0, %v851
          %v853 = vpop.f32.mrb[0].mxu0
          %854 = vmatprep.mubr.f32.mxu0 0.0
          %855 = vmatmul.mubr.f32.gmra.mrb[0].mxu0 %v777
          %v856 = vpop.f32.mrb[0].mxu0
          %v857 = vadd.f32 0.0, %v856
          %v858 = vpop.f32.mrb[0].mxu0
          %859 = vmatprep.mubr.f32.mxu0 0.0
          %860 = vmatmul.mubr.f32.gmra.mrb[0].mxu0 %v780
          %v861 = vpop.f32.mrb[0].mxu0
          %v862 = vadd.f32 0.0, %v861
          %v863 = vpop.f32.mrb[0].mxu0
          %864 = vmatprep.mubr.f32.mxu0 0.0
          %865 = vmatmul.mubr.f32.gmra.mrb[0].mxu0 %v783
          %v866 = vpop.f32.mrb[0].mxu0
          %v867 = vadd.f32 0.0, %v866
          %v868 = vpop.f32.mrb[0].mxu0
          %869 = vdwg.mxu0
          %s870 = scalar_lea.vmem %s189, %s208 [#allocation5]
          %871 = vst [vmem:[%s870] sm:$0xff] %v852
          %872 = vst [vmem:[%s870 + $0x8] sm:$0xff] %v857
          %873 = vst [vmem:[%s870 + $0x10] sm:$0xff] %v862
          %874 = vst [vmem:[%s870 + $0x18] sm:$0xff] %v867
        $region41: #{tpu_custom_call.1} parent=31 // loop_footer
          %s207 = sadd.s32 1, %s203
        $region42: #{tpu_custom_call.1} parent=31 // loop_footer_branch
          %202 = sbr.rel target = $region38
        $region43: #{tpu_custom_call.1} parent=31 // loop_exit
          _
        %s875 = sand.u32 %s96, 1
        %s876 = scalar_lea.sflag [#allocation4], %s875
        %s877 = sand.u32 %s96, 1
        %s878 = smul.addr %s877, 256
        %s879 = scalar_lea.vmem [#allocation5], %s878
        // Predicated region
        $region44: #{tpu_custom_call.1} parent=31 // pred_check
          %p880 = pneg %p106
        $region45: #{tpu_custom_call.1} parent=31 // pred_check_branch
          %882 = sbr.rel (%p880) target = $region47
        $region46: #{tpu_custom_call.1} parent=31 // pred_region
          %s883 = smul.u32 8, %s20
          %s885 = ssub.s32 4096, 4096
          %886 = vsyncadd %s876, %s885
          %s887 = smul.addr %s883, 4
          %s888 = smul.addr %s887, 128
          %s889 = scalar_lea.hbm %s3, %s888
          %s890 = sshll.u32 %s879, 4
          %s891 = int_to_ptr.vmem [resolvable:$true] %s890
          %896 = dma.vmem_to_hbm [thread:$0]  %s891, 4096, %s889, %s876, 128, 128, 8
        $region47: #{tpu_custom_call.1} parent=31 // pred_fallthru
          _
      $region32: #{tpu_custom_call.1} parent=5 // pred_fallthru
        _
      %p897 = scmp.le.s32.totalorder 2, %s15
      // Predicated region
      $region48: #{tpu_custom_call.1} parent=5 // pred_check
        %p898 = pneg %p897
      $region49: #{tpu_custom_call.1} parent=5 // pred_check_branch
        %900 = sbr.rel (%p898) target = $region51
      $region50: #{tpu_custom_call.1} parent=5 // pred_region
        %s901 = ssub.s32 %s15, 2
        // Predicated region
        $region52: #{tpu_custom_call.1} parent=50 // pred_check
          %p902 = pneg %p112
        $region53: #{tpu_custom_call.1} parent=50 // pred_check_branch
          %904 = sbr.rel (%p902) target = $region55
        $region54: #{tpu_custom_call.1} parent=50 // pred_region
          %s905 = sand.u32 %s97, 1
          %s906 = scalar_lea.sflag [#allocation4], %s905
          %s907 = sand.u32 %s97, 1
          %s908 = smul.addr %s907, 256
          %s909 = scalar_lea.vmem [#allocation5], %s908
          %910 = dma.done %s906, 4096
        $region55: #{tpu_custom_call.1} parent=50 // pred_fallthru
          _
      $region51: #{tpu_custom_call.1} parent=5 // pred_fallthru
        _
    $region6: #{tpu_custom_call.1} parent=1 // loop_footer
      %s19 = sadd.s32 1, %s15
    $region7: #{tpu_custom_call.1} parent=1 // loop_footer_branch
      %14 = sbr.rel target = $region3
    $region8: #{tpu_custom_call.1} parent=1 // loop_exit
      _
    %911 = vsyncpa [#allocation3], 1
    %s912 = scalar_lea.sflag [#allocation3], 1
    %913 = vsyncpa %s912, 1
    %914 = vsyncpa [#allocation4], 1
    %s915 = scalar_lea.sflag [#allocation4], 1
    %916 = vsyncpa %s915, 1

</llo_original>
